<compile_context>
chip_gen: v6e
topology: v6e:2x2x1
jax: 0.10.0
libtpu: 0.0.40
codegen_flags: <defaults>
</compile_context>

<pallas_src>
import functools

import jax
import jax.numpy as jnp
from jax.experimental import pallas as pl
from jax.experimental.pallas import tpu as pltpu

USE_LN = True  # Role_Embedding = [Linear, LayerNorm] when args.use_ln is set


def _round_up(x, m):
    return ((x + m - 1) // m) * m


def _pad_last(a, n):
    pad = n - a.shape[-1]
    return a if pad == 0 else jnp.pad(a, ((0, 0), (0, pad)))


# ---------------------------------------------------------------------------
# Kernel
# ---------------------------------------------------------------------------
def recl_forward_kernel(obs_ref, act_ref,
                        w1o_ref, w1a_ref, b1_ref,
                        wir_ref, wiz_ref, win_ref,
                        br_ref, bz_ref, bin_ref, bhn_ref,
                        w2_ref, b2_ref,
                        wrole_ref, brole_ref, gamma_ref, beta_ref,
                        out_ref, *, role_dim, use_ln):
    obs = obs_ref[...]                      # (TB, obs_dim)
    act = act_ref[...]                      # (TB, action_dim)

    # --- Agent_Embedding.fc1 + relu (concat folded into two matmuls) ---
    f1 = (jnp.dot(obs, w1o_ref[...], preferred_element_type=jnp.float32)
          + jnp.dot(act, w1a_ref[...], preferred_element_type=jnp.float32)
          + b1_ref[...])
    f1 = jnp.maximum(f1, 0.0)

    # --- GRUCell with h_prev == 0 (rnn_hidden is None => zeros):
    #       r = sigmoid(x W_ir + b_ir + b_hr)
    #       z = sigmoid(x W_iz + b_iz + b_hz)
    #       n = tanh   (x W_in + b_in + r * b_hn)
    #       h = (1 - z) * n
    r = jax.nn.sigmoid(
        jnp.dot(f1, wir_ref[...], preferred_element_type=jnp.float32) + br_ref[...])
    z = jax.nn.sigmoid(
        jnp.dot(f1, wiz_ref[...], preferred_element_type=jnp.float32) + bz_ref[...])
    n = jnp.tanh(
        jnp.dot(f1, win_ref[...], preferred_element_type=jnp.float32)
        + bin_ref[...] + r * bhn_ref[...])
    h = (1.0 - z) * n

    # --- Agent_Embedding.fc2 -> agent embedding ---
    agent_emb = (jnp.dot(h, w2_ref[...], preferred_element_type=jnp.float32)
                 + b2_ref[...])

    # --- Role_Embedding: Linear (+ LayerNorm) in a lane-dense 128-wide slab ---
    # Padded columns of wrole/brole are exactly zero, so padded lanes of `role`
    # are exactly 0 and full-slab reductions equal reductions over role_dim.
    role = (jnp.dot(agent_emb, wrole_ref[...], preferred_element_type=jnp.float32)
            + brole_ref[...])
    if use_ln:
        inv_r = 1.0 / role_dim
        mean = jnp.sum(role, axis=-1, keepdims=True) * inv_r
        ex2 = jnp.sum(role * role, axis=-1, keepdims=True) * inv_r
        var = ex2 - mean * mean                       # biased variance (torch LayerNorm)
        role = (role - mean) * jax.lax.rsqrt(var + 1e-5)
        role = role * gamma_ref[...] + beta_ref[...]  # padded gamma/beta are 0

    out_ref[...] = role.astype(out_ref.dtype)


# ---------------------------------------------------------------------------
# Wrapper
# ---------------------------------------------------------------------------
PARAM_ORDER = ("w1o", "w1a", "b1",
               "wir", "wiz", "win",
               "br", "bz", "bin", "bhn",
               "w2", "b2",
               "wrole", "brole", "gamma", "beta")


def recl_net_forward(obs, action, kparams, *, role_dim, use_ln=USE_LN, block_b=1024):
    """Fused RECL_NET.forward. obs: (B, obs_dim), action: (B, action_dim)."""
    obs = obs.astype(jnp.float32)
    action = action.astype(jnp.float32)
    B, obs_dim = obs.shape
    action_dim = action.shape[1]
    RP = kparams["wrole"].shape[1]          # lane-padded role width (multiple of 128)

    # Batch tile: large enough to amortize the ~0.35us per-step overhead, small
    # enough for v7x's 64 MiB VMEM (per-step live activations ~ TB * 2 KiB f32).
    tb = min(block_b, _round_up(B, 8))
    bp = _round_up(B, tb)
    if bp != B:
        pad = bp - B
        obs = jnp.pad(obs, ((0, pad), (0, 0)))
        action = jnp.pad(action, ((0, pad), (0, 0)))
    grid = (bp // tb,)

    def row_spec(d):
        return pl.BlockSpec((tb, d), lambda i: (i, 0))

    def const_spec(shape):
        # Weights/biases: whole array, constant block index -> stays resident.
        return pl.BlockSpec(shape, lambda i: (0,) * len(shape))

    param_args = tuple(kparams[k] for k in PARAM_ORDER)
    in_specs = ([row_spec(obs_dim), row_spec(action_dim)]
                + [const_spec(kparams[k].shape) for k in PARAM_ORDER])

    kernel = functools.partial(recl_forward_kernel, role_dim=role_dim, use_ln=use_ln)
    out = pl.pallas_call(
        kernel,
        out_shape=jax.ShapeDtypeStruct((bp, RP), jnp.float32),
        grid=grid,
        in_specs=in_specs,
        out_specs=pl.BlockSpec((tb, RP), lambda i: (i, 0)),
        compiler_params=pltpu.CompilerParams(
            dimension_semantics=("parallel",)),
    )(obs, action, *param_args)
    return out[:B, :role_dim]


# ---------------------------------------------------------------------------
# Parameters
# ---------------------------------------------------------------------------
def init_params(key, obs_dim, action_dim, emb_dim, role_dim):
    """Torch-faithful parameter layout: weights (in, out); GRU packed [r|z|n]."""
    ks = jax.random.split(key, 12)
    u = lambda k, shape, bound: jax.random.uniform(
        k, shape, jnp.float32, minval=-bound, maxval=bound)
    in_dim = obs_dim + action_dim
    b1 = 1.0 / jnp.sqrt(in_dim)
    bg = 1.0 / jnp.sqrt(emb_dim)
    return {
        # fc1
        "w1": u(ks[0], (in_dim, emb_dim), b1), "b1": u(ks[1], (1, emb_dim), b1),
        # GRUCell (packed [r|z|n] along output axis)
        "wih": u(ks[2], (emb_dim, 3 * emb_dim), bg), "bih": u(ks[3], (1, 3 * emb_dim), bg),
        "whh": u(ks[4], (emb_dim, 3 * emb_dim), bg), "bhh": u(ks[5], (1, 3 * emb_dim), bg),
        # fc2
        "w2": u(ks[6], (emb_dim, emb_dim), bg), "b2": u(ks[7], (1, emb_dim), bg),
        # role embedding linear
        "wr": u(ks[8], (emb_dim, role_dim), bg), "br": u(ks[9], (1, role_dim), bg),
        # layer norm
        "ln_gamma": jnp.ones((1, role_dim), jnp.float32),
        "ln_beta": jnp.zeros((1, role_dim), jnp.float32),
    }


def prepare_kernel_params(params, obs_dim):
    """One-time re-layout of torch params for the kernel:
      - split fc1 weight into [obs | action] halves (no wrapper concat),
      - split packed GRU gates [r|z|n] into per-gate (E,E) matrices,
      - fold the dead hidden biases for r/z into the input biases (h0 == 0),
      - zero-pad the role head to a lane-dense 128-wide output slab."""
    E = params["w2"].shape[0]
    R = params["wr"].shape[1]
    RP = _round_up(R, 128)
    wih, bih, bhh = params["wih"], params["bih"], params["bhh"]
    return {
        "w1o": params["w1"][:obs_dim],
        "w1a": params["w1"][obs_dim:],
        "b1": params["b1"],
        "wir": wih[:, 0:E], "wiz": wih[:, E:2 * E], "win": wih[:, 2 * E:3 * E],
        "br": bih[:, 0:E] + bhh[:, 0:E],
        "bz": bih[:, E:2 * E] + bhh[:, E:2 * E],
        "bin": bih[:, 2 * E:3 * E],
        "bhn": bhh[:, 2 * E:3 * E],
        "w2": params["w2"], "b2": params["b2"],
        "wrole": _pad_last(params["wr"], RP),
        "brole": _pad_last(params["br"], RP),
        "gamma": _pad_last(params["ln_gamma"], RP),
        "beta": _pad_last(params["ln_beta"], RP),
    }


# ---------------------------------------------------------------------------
# Pure-JAX reference (torch-faithful, including the dead h0/W_hh path)
# ---------------------------------------------------------------------------
def recl_net_forward_ref(obs, action, params, *, use_ln=USE_LN):
    x = jnp.concatenate([obs, action], axis=-1)
    E = params["w2"].shape[0]
    h0 = jnp.zeros((x.shape[0], E), jnp.float32)
    f1 = jax.nn.relu(x @ params["w1"] + params["b1"])
    gi = f1 @ params["wih"] + params["bih"]
    gh = h0 @ params["whh"] + params["bhh"]
    i_r, i_z, i_n = gi[:, :E], gi[:, E:2 * E], gi[:, 2 * E:]
    h_r, h_z, h_n = gh[:, :E], gh[:, E:2 * E], gh[:, 2 * E:]
    r = jax.nn.sigmoid(i_r + h_r)
    z = jax.nn.sigmoid(i_z + h_z)
    n = jnp.tanh(i_n + r * h_n)
    h = (1.0 - z) * n + z * h0
    ae = h @ params["w2"] + params["b2"]
    role = ae @ params["wr"] + params["br"]
    if use_ln:
        mean = jnp.mean(role, axis=-1, keepdims=True)
        var = jnp.mean((role - mean) ** 2, axis=-1, keepdims=True)
        role = (role - mean) * jax.lax.rsqrt(var + 1e-5)
        role = role * params["ln_gamma"] + params["ln_beta"]
    return role


if __name__ == "__main__":
    # Small, module-consistent sizes: N=4 agents, 2 episodes -> batch = 8 rows.
    obs_dim, action_dim = 16, 6
    agent_embedding_dim, role_embedding_dim = 32, 16
    batch = 8

    key = jax.random.PRNGKey(0)
    k_obs, k_act, k_par = jax.random.split(key, 3)
    obs = jax.random.normal(k_obs, (batch, obs_dim), jnp.float32)
    action = jax.random.normal(k_act, (batch, action_dim), jnp.float32)
    params = init_params(k_par, obs_dim, action_dim,
                         agent_embedding_dim, role_embedding_dim)
    kparams = prepare_kernel_params(params, obs_dim)

    out = recl_net_forward(obs, action, kparams, role_dim=role_embedding_dim)
    out = jax.block_until_ready(out)
    ref = recl_net_forward_ref(obs, action, params)
    assert out.shape == (batch, role_embedding_dim)
    assert jnp.allclose(out, ref, atol=1e-4, rtol=1e-4), "mismatch vs pure-JAX reference"

    # Exercise the multi-step grid + batch-padding path (B not a tile multiple).
    batch2 = 20
    k_o2, k_a2 = jax.random.split(jax.random.PRNGKey(1), 2)
    obs2 = jax.random.normal(k_o2, (batch2, obs_dim), jnp.float32)
    act2 = jax.random.normal(k_a2, (batch2, action_dim), jnp.float32)
    out2 = jax.block_until_ready(
        recl_net_forward(obs2, act2, kparams, role_dim=role_embedding_dim, block_b=8))
    ref2 = recl_net_forward_ref(obs2, act2, params)
    assert out2.shape == (batch2, role_embedding_dim)
    assert jnp.allclose(out2, ref2, atol=1e-4, rtol=1e-4), "mismatch (tiled path)"

    print("KERNEL_OK")
</pallas_src>

<mosaic_0001>
module attributes {stable_mosaic.version = 11 : i64} {
  func.func @recl_forward_kernel(%arg0: i32, %arg1: memref<8x16xf32, #tpu.memory_space<vmem>>, %arg2: memref<8x6xf32, #tpu.memory_space<vmem>>, %arg3: memref<16x32xf32, #tpu.memory_space<vmem>>, %arg4: memref<6x32xf32, #tpu.memory_space<vmem>>, %arg5: memref<1x32xf32, #tpu.memory_space<vmem>>, %arg6: memref<32x32xf32, #tpu.memory_space<vmem>>, %arg7: memref<32x32xf32, #tpu.memory_space<vmem>>, %arg8: memref<32x32xf32, #tpu.memory_space<vmem>>, %arg9: memref<1x32xf32, #tpu.memory_space<vmem>>, %arg10: memref<1x32xf32, #tpu.memory_space<vmem>>, %arg11: memref<1x32xf32, #tpu.memory_space<vmem>>, %arg12: memref<1x32xf32, #tpu.memory_space<vmem>>, %arg13: memref<32x32xf32, #tpu.memory_space<vmem>>, %arg14: memref<1x32xf32, #tpu.memory_space<vmem>>, %arg15: memref<32x128xf32, #tpu.memory_space<vmem>>, %arg16: memref<1x128xf32, #tpu.memory_space<vmem>>, %arg17: memref<1x128xf32, #tpu.memory_space<vmem>>, %arg18: memref<1x128xf32, #tpu.memory_space<vmem>>, %arg19: memref<8x128xf32, #tpu.memory_space<vmem>>) attributes {dimension_semantics = [#tpu.dimension_semantics<parallel>], iteration_bounds = array<i64: 1>, scalar_prefetch = 0 : i64, scratch_operands = 0 : i64, tpu.core_type = #tpu.core_type<tc>, window_params = [{transform_indices = @transform_0, window_bounds = array<i64: 8, 16>}, {transform_indices = @transform_1, window_bounds = array<i64: 8, 6>}, {pipeline_mode = #tpu.pipeline_mode<synchronous>, transform_indices = @transform_2, window_bounds = array<i64: 16, 32>}, {pipeline_mode = #tpu.pipeline_mode<synchronous>, transform_indices = @transform_3, window_bounds = array<i64: 6, 32>}, {pipeline_mode = #tpu.pipeline_mode<synchronous>, transform_indices = @transform_4, window_bounds = array<i64: 1, 32>}, {pipeline_mode = #tpu.pipeline_mode<synchronous>, transform_indices = @transform_5, window_bounds = array<i64: 32, 32>}, {pipeline_mode = #tpu.pipeline_mode<synchronous>, transform_indices = @transform_6, window_bounds = array<i64: 32, 32>}, {pipeline_mode = #tpu.pipeline_mode<synchronous>, transform_indices = @transform_7, window_bounds = array<i64: 32, 32>}, {pipeline_mode = #tpu.pipeline_mode<synchronous>, transform_indices = @transform_8, window_bounds = array<i64: 1, 32>}, {pipeline_mode = #tpu.pipeline_mode<synchronous>, transform_indices = @transform_9, window_bounds = array<i64: 1, 32>}, {pipeline_mode = #tpu.pipeline_mode<synchronous>, transform_indices = @transform_10, window_bounds = array<i64: 1, 32>}, {pipeline_mode = #tpu.pipeline_mode<synchronous>, transform_indices = @transform_11, window_bounds = array<i64: 1, 32>}, {pipeline_mode = #tpu.pipeline_mode<synchronous>, transform_indices = @transform_12, window_bounds = array<i64: 32, 32>}, {pipeline_mode = #tpu.pipeline_mode<synchronous>, transform_indices = @transform_13, window_bounds = array<i64: 1, 32>}, {pipeline_mode = #tpu.pipeline_mode<synchronous>, transform_indices = @transform_14, window_bounds = array<i64: 32, 128>}, {pipeline_mode = #tpu.pipeline_mode<synchronous>, transform_indices = @transform_15, window_bounds = array<i64: 1, 128>}, {pipeline_mode = #tpu.pipeline_mode<synchronous>, transform_indices = @transform_16, window_bounds = array<i64: 1, 128>}, {pipeline_mode = #tpu.pipeline_mode<synchronous>, transform_indices = @transform_17, window_bounds = array<i64: 1, 128>}, {transform_indices = @transform_18, window_bounds = array<i64: 8, 128>}]} {
    %c0 = arith.constant 0 : index
    %c0_0 = arith.constant 0 : index
    %0 = vector.load %arg1[%c0, %c0_0] : memref<8x16xf32, #tpu.memory_space<vmem>>, vector<8x16xf32>
    %c0_1 = arith.constant 0 : index
    %c0_2 = arith.constant 0 : index
    %1 = vector.load %arg2[%c0_1, %c0_2] : memref<8x6xf32, #tpu.memory_space<vmem>>, vector<8x6xf32>
    %c0_3 = arith.constant 0 : index
    %c0_4 = arith.constant 0 : index
    %2 = vector.load %arg3[%c0_3, %c0_4] : memref<16x32xf32, #tpu.memory_space<vmem>>, vector<16x32xf32>
    %cst = arith.constant dense<0.000000e+00> : vector<8x32xf32>
    %3 = tpu.matmul %0, %2, %cst {dimension_numbers = #tpu.dot_dimension_numbers<[1], [0], [0], [1], [0, 0, 1, 1], [], []>} : vector<8x16xf32>, vector<16x32xf32>, vector<8x32xf32> -> vector<8x32xf32>
    %c0_5 = arith.constant 0 : index
    %c0_6 = arith.constant 0 : index
    %4 = vector.load %arg4[%c0_5, %c0_6] : memref<6x32xf32, #tpu.memory_space<vmem>>, vector<6x32xf32>
    %cst_7 = arith.constant dense<0.000000e+00> : vector<8x32xf32>
    %5 = tpu.matmul %1, %4, %cst_7 {dimension_numbers = #tpu.dot_dimension_numbers<[1], [0], [0], [1], [0, 0, 1, 1], [], []>} : vector<8x6xf32>, vector<6x32xf32>, vector<8x32xf32> -> vector<8x32xf32>
    %6 = arith.addf %3, %5 : vector<8x32xf32>
    %c0_8 = arith.constant 0 : index
    %c0_9 = arith.constant 0 : index
    %7 = vector.load %arg5[%c0_8, %c0_9] : memref<1x32xf32, #tpu.memory_space<vmem>>, vector<1x32xf32>
    %8 = vector.broadcast %7 : vector<1x32xf32> to vector<8x32xf32>
    %9 = arith.addf %6, %8 : vector<8x32xf32>
    %cst_10 = arith.constant 0.000000e+00 : f32
    %10 = vector.broadcast %cst_10 : f32 to vector<8x32xf32>
    %11 = arith.maximumf %9, %10 : vector<8x32xf32>
    %c0_11 = arith.constant 0 : index
    %c0_12 = arith.constant 0 : index
    %12 = vector.load %arg6[%c0_11, %c0_12] : memref<32x32xf32, #tpu.memory_space<vmem>>, vector<32x32xf32>
    %cst_13 = arith.constant dense<0.000000e+00> : vector<8x32xf32>
    %13 = tpu.matmul %11, %12, %cst_13 {dimension_numbers = #tpu.dot_dimension_numbers<[1], [0], [0], [1], [0, 0, 1, 1], [], []>} : vector<8x32xf32>, vector<32x32xf32>, vector<8x32xf32> -> vector<8x32xf32>
    %c0_14 = arith.constant 0 : index
    %c0_15 = arith.constant 0 : index
    %14 = vector.load %arg9[%c0_14, %c0_15] : memref<1x32xf32, #tpu.memory_space<vmem>>, vector<1x32xf32>
    %15 = vector.broadcast %14 : vector<1x32xf32> to vector<8x32xf32>
    %16 = arith.addf %13, %15 : vector<8x32xf32>
    %17 = arith.negf %16 : vector<8x32xf32>
    %18 = math.exp %17 : vector<8x32xf32>
    %cst_16 = arith.constant 1.000000e+00 : f32
    %19 = vector.broadcast %cst_16 : f32 to vector<8x32xf32>
    %20 = arith.addf %19, %18 : vector<8x32xf32>
    %21 = arith.divf %19, %20 : vector<8x32xf32>
    %c0_17 = arith.constant 0 : index
    %c0_18 = arith.constant 0 : index
    %22 = vector.load %arg7[%c0_17, %c0_18] : memref<32x32xf32, #tpu.memory_space<vmem>>, vector<32x32xf32>
    %cst_19 = arith.constant dense<0.000000e+00> : vector<8x32xf32>
    %23 = tpu.matmul %11, %22, %cst_19 {dimension_numbers = #tpu.dot_dimension_numbers<[1], [0], [0], [1], [0, 0, 1, 1], [], []>} : vector<8x32xf32>, vector<32x32xf32>, vector<8x32xf32> -> vector<8x32xf32>
    %c0_20 = arith.constant 0 : index
    %c0_21 = arith.constant 0 : index
    %24 = vector.load %arg10[%c0_20, %c0_21] : memref<1x32xf32, #tpu.memory_space<vmem>>, vector<1x32xf32>
    %25 = vector.broadcast %24 : vector<1x32xf32> to vector<8x32xf32>
    %26 = arith.addf %23, %25 : vector<8x32xf32>
    %27 = arith.negf %26 : vector<8x32xf32>
    %28 = math.exp %27 : vector<8x32xf32>
    %cst_22 = arith.constant 1.000000e+00 : f32
    %29 = vector.broadcast %cst_22 : f32 to vector<8x32xf32>
    %30 = arith.addf %29, %28 : vector<8x32xf32>
    %31 = arith.divf %29, %30 : vector<8x32xf32>
    %c0_23 = arith.constant 0 : index
    %c0_24 = arith.constant 0 : index
    %32 = vector.load %arg8[%c0_23, %c0_24] : memref<32x32xf32, #tpu.memory_space<vmem>>, vector<32x32xf32>
    %cst_25 = arith.constant dense<0.000000e+00> : vector<8x32xf32>
    %33 = tpu.matmul %11, %32, %cst_25 {dimension_numbers = #tpu.dot_dimension_numbers<[1], [0], [0], [1], [0, 0, 1, 1], [], []>} : vector<8x32xf32>, vector<32x32xf32>, vector<8x32xf32> -> vector<8x32xf32>
    %c0_26 = arith.constant 0 : index
    %c0_27 = arith.constant 0 : index
    %34 = vector.load %arg11[%c0_26, %c0_27] : memref<1x32xf32, #tpu.memory_space<vmem>>, vector<1x32xf32>
    %35 = vector.broadcast %34 : vector<1x32xf32> to vector<8x32xf32>
    %36 = arith.addf %33, %35 : vector<8x32xf32>
    %c0_28 = arith.constant 0 : index
    %c0_29 = arith.constant 0 : index
    %37 = vector.load %arg12[%c0_28, %c0_29] : memref<1x32xf32, #tpu.memory_space<vmem>>, vector<1x32xf32>
    %38 = vector.broadcast %37 : vector<1x32xf32> to vector<8x32xf32>
    %39 = arith.mulf %21, %38 : vector<8x32xf32>
    %40 = arith.addf %36, %39 : vector<8x32xf32>
    %41 = math.tanh %40 : vector<8x32xf32>
    %cst_30 = arith.constant 1.000000e+00 : f32
    %42 = vector.broadcast %cst_30 : f32 to vector<8x32xf32>
    %43 = arith.subf %42, %31 : vector<8x32xf32>
    %44 = arith.mulf %43, %41 : vector<8x32xf32>
    %c0_31 = arith.constant 0 : index
    %c0_32 = arith.constant 0 : index
    %45 = vector.load %arg13[%c0_31, %c0_32] : memref<32x32xf32, #tpu.memory_space<vmem>>, vector<32x32xf32>
    %cst_33 = arith.constant dense<0.000000e+00> : vector<8x32xf32>
    %46 = tpu.matmul %44, %45, %cst_33 {dimension_numbers = #tpu.dot_dimension_numbers<[1], [0], [0], [1], [0, 0, 1, 1], [], []>} : vector<8x32xf32>, vector<32x32xf32>, vector<8x32xf32> -> vector<8x32xf32>
    %c0_34 = arith.constant 0 : index
    %c0_35 = arith.constant 0 : index
    %47 = vector.load %arg14[%c0_34, %c0_35] : memref<1x32xf32, #tpu.memory_space<vmem>>, vector<1x32xf32>
    %48 = vector.broadcast %47 : vector<1x32xf32> to vector<8x32xf32>
    %49 = arith.addf %46, %48 : vector<8x32xf32>
    %c0_36 = arith.constant 0 : index
    %c0_37 = arith.constant 0 : index
    %50 = vector.load %arg15[%c0_36, %c0_37] : memref<32x128xf32, #tpu.memory_space<vmem>>, vector<32x128xf32>
    %cst_38 = arith.constant dense<0.000000e+00> : vector<8x128xf32>
    %51 = tpu.matmul %49, %50, %cst_38 {dimension_numbers = #tpu.dot_dimension_numbers<[1], [0], [0], [1], [0, 0, 1, 1], [], []>} : vector<8x32xf32>, vector<32x128xf32>, vector<8x128xf32> -> vector<8x128xf32>
    %c0_39 = arith.constant 0 : index
    %c0_40 = arith.constant 0 : index
    %52 = vector.load %arg16[%c0_39, %c0_40] : memref<1x128xf32, #tpu.memory_space<vmem>>, vector<1x128xf32>
    %53 = vector.broadcast %52 : vector<1x128xf32> to vector<8x128xf32>
    %54 = arith.addf %51, %53 : vector<8x128xf32>
    %cst_41 = arith.constant dense<0.000000e+00> : vector<8xf32>
    %55 = vector.multi_reduction <add>, %54, %cst_41 [1] : vector<8x128xf32> to vector<8xf32>
    %56 = vector.shape_cast %55 : vector<8xf32> to vector<8x1xf32>
    %cst_42 = arith.constant 6.250000e-02 : f32
    %57 = vector.broadcast %cst_42 : f32 to vector<8x1xf32>
    %58 = arith.mulf %56, %57 : vector<8x1xf32>
    %59 = arith.mulf %54, %54 : vector<8x128xf32>
    %cst_43 = arith.constant dense<0.000000e+00> : vector<8xf32>
    %60 = vector.multi_reduction <add>, %59, %cst_43 [1] : vector<8x128xf32> to vector<8xf32>
    %61 = vector.shape_cast %60 : vector<8xf32> to vector<8x1xf32>
    %cst_44 = arith.constant 6.250000e-02 : f32
    %62 = vector.broadcast %cst_44 : f32 to vector<8x1xf32>
    %63 = arith.mulf %61, %62 : vector<8x1xf32>
    %64 = arith.mulf %58, %58 : vector<8x1xf32>
    %65 = arith.subf %63, %64 : vector<8x1xf32>
    %66 = vector.broadcast %58 : vector<8x1xf32> to vector<8x128xf32>
    %67 = arith.subf %54, %66 : vector<8x128xf32>
    %cst_45 = arith.constant 9.99999974E-6 : f32
    %68 = vector.broadcast %cst_45 : f32 to vector<8x1xf32>
    %69 = arith.addf %65, %68 : vector<8x1xf32>
    %70 = math.rsqrt %69 : vector<8x1xf32>
    %71 = vector.broadcast %70 : vector<8x1xf32> to vector<8x128xf32>
    %72 = arith.mulf %67, %71 : vector<8x128xf32>
    %c0_46 = arith.constant 0 : index
    %c0_47 = arith.constant 0 : index
    %73 = vector.load %arg17[%c0_46, %c0_47] : memref<1x128xf32, #tpu.memory_space<vmem>>, vector<1x128xf32>
    %74 = vector.broadcast %73 : vector<1x128xf32> to vector<8x128xf32>
    %75 = arith.mulf %72, %74 : vector<8x128xf32>
    %c0_48 = arith.constant 0 : index
    %c0_49 = arith.constant 0 : index
    %76 = vector.load %arg18[%c0_48, %c0_49] : memref<1x128xf32, #tpu.memory_space<vmem>>, vector<1x128xf32>
    %77 = vector.broadcast %76 : vector<1x128xf32> to vector<8x128xf32>
    %78 = arith.addf %75, %77 : vector<8x128xf32>
    %c0_50 = arith.constant 0 : index
    %c0_51 = arith.constant 0 : index
    %79 = vector.load %arg19[%c0_50, %c0_51] : memref<8x128xf32, #tpu.memory_space<vmem>>, vector<8x128xf32>
    tpu.vector_store %arg19[%c0_50, %c0_51], %78 {strides = array<i32>} : memref<8x128xf32, #tpu.memory_space<vmem>>, vector<8x128xf32>,
    return
  }
  func.func @transform_0(%arg0: i32) -> (i32, i32) {
    %c0_i32 = arith.constant 0 : i32
    %c0_i32_0 = arith.constant 0 : i32
    return %arg0, %c0_i32 : i32, i32
  }
  func.func @transform_1(%arg0: i32) -> (i32, i32) {
    %c0_i32 = arith.constant 0 : i32
    %c0_i32_0 = arith.constant 0 : i32
    return %arg0, %c0_i32 : i32, i32
  }
  func.func @transform_2(%arg0: i32) -> (i32, i32) {
    %c0_i32 = arith.constant 0 : i32
    %c0_i32_0 = arith.constant 0 : i32
    %c0_i32_1 = arith.constant 0 : i32
    return %c0_i32, %c0_i32_0 : i32, i32
  }
  func.func @transform_3(%arg0: i32) -> (i32, i32) {
    %c0_i32 = arith.constant 0 : i32
    %c0_i32_0 = arith.constant 0 : i32
    %c0_i32_1 = arith.constant 0 : i32
    return %c0_i32, %c0_i32_0 : i32, i32
  }
  func.func @transform_4(%arg0: i32) -> (i32, i32) {
    %c0_i32 = arith.constant 0 : i32
    %c0_i32_0 = arith.constant 0 : i32
    %c0_i32_1 = arith.constant 0 : i32
    return %c0_i32, %c0_i32_0 : i32, i32
  }
  func.func @transform_5(%arg0: i32) -> (i32, i32) {
    %c0_i32 = arith.constant 0 : i32
    %c0_i32_0 = arith.constant 0 : i32
    %c0_i32_1 = arith.constant 0 : i32
    return %c0_i32, %c0_i32_0 : i32, i32
  }
  func.func @transform_6(%arg0: i32) -> (i32, i32) {
    %c0_i32 = arith.constant 0 : i32
    %c0_i32_0 = arith.constant 0 : i32
    %c0_i32_1 = arith.constant 0 : i32
    return %c0_i32, %c0_i32_0 : i32, i32
  }
  func.func @transform_7(%arg0: i32) -> (i32, i32) {
    %c0_i32 = arith.constant 0 : i32
    %c0_i32_0 = arith.constant 0 : i32
    %c0_i32_1 = arith.constant 0 : i32
    return %c0_i32, %c0_i32_0 : i32, i32
  }
  func.func @transform_8(%arg0: i32) -> (i32, i32) {
    %c0_i32 = arith.constant 0 : i32
    %c0_i32_0 = arith.constant 0 : i32
    %c0_i32_1 = arith.constant 0 : i32
    return %c0_i32, %c0_i32_0 : i32, i32
  }
  func.func @transform_9(%arg0: i32) -> (i32, i32) {
    %c0_i32 = arith.constant 0 : i32
    %c0_i32_0 = arith.constant 0 : i32
    %c0_i32_1 = arith.constant 0 : i32
    return %c0_i32, %c0_i32_0 : i32, i32
  }
  func.func @transform_10(%arg0: i32) -> (i32, i32) {
    %c0_i32 = arith.constant 0 : i32
    %c0_i32_0 = arith.constant 0 : i32
    %c0_i32_1 = arith.constant 0 : i32
    return %c0_i32, %c0_i32_0 : i32, i32
  }
  func.func @transform_11(%arg0: i32) -> (i32, i32) {
    %c0_i32 = arith.constant 0 : i32
    %c0_i32_0 = arith.constant 0 : i32
    %c0_i32_1 = arith.constant 0 : i32
    return %c0_i32, %c0_i32_0 : i32, i32
  }
  func.func @transform_12(%arg0: i32) -> (i32, i32) {
    %c0_i32 = arith.constant 0 : i32
    %c0_i32_0 = arith.constant 0 : i32
    %c0_i32_1 = arith.constant 0 : i32
    return %c0_i32, %c0_i32_0 : i32, i32
  }
  func.func @transform_13(%arg0: i32) -> (i32, i32) {
    %c0_i32 = arith.constant 0 : i32
    %c0_i32_0 = arith.constant 0 : i32
    %c0_i32_1 = arith.constant 0 : i32
    return %c0_i32, %c0_i32_0 : i32, i32
  }
  func.func @transform_14(%arg0: i32) -> (i32, i32) {
    %c0_i32 = arith.constant 0 : i32
    %c0_i32_0 = arith.constant 0 : i32
    %c0_i32_1 = arith.constant 0 : i32
    return %c0_i32, %c0_i32_0 : i32, i32
  }
  func.func @transform_15(%arg0: i32) -> (i32, i32) {
    %c0_i32 = arith.constant 0 : i32
    %c0_i32_0 = arith.constant 0 : i32
    %c0_i32_1 = arith.constant 0 : i32
    return %c0_i32, %c0_i32_0 : i32, i32
  }
  func.func @transform_16(%arg0: i32) -> (i32, i32) {
    %c0_i32 = arith.constant 0 : i32
    %c0_i32_0 = arith.constant 0 : i32
    %c0_i32_1 = arith.constant 0 : i32
    return %c0_i32, %c0_i32_0 : i32, i32
  }
  func.func @transform_17(%arg0: i32) -> (i32, i32) {
    %c0_i32 = arith.constant 0 : i32
    %c0_i32_0 = arith.constant 0 : i32
    %c0_i32_1 = arith.constant 0 : i32
    return %c0_i32, %c0_i32_0 : i32, i32
  }
  func.func @transform_18(%arg0: i32) -> (i32, i32) {
    %c0_i32 = arith.constant 0 : i32
    %c0_i32_0 = arith.constant 0 : i32
    return %arg0, %c0_i32 : i32, i32
  }
}

</mosaic_0001>

<llo_original>
// kernel: tpu_custom_call.1
$region0: #{tpu_custom_call.1}
  #allocation0 [shape = 'u32[]', space=smem, size = 0x4, offset = 0x4, fixed_abs, tag = 'smem constant byte address 0x4 - core index']
  #allocation1 [shape = 'u32[144,128]{1,0:T(1,128)}', space=vmem, size = 0x12000, scoped, tag = 'internal scratch']
  %s0 = inlined_call_operand.hbm [shape: f32[8,16], index: 0, kind: input, shape index: {}]
  %s1 = inlined_call_operand.hbm [shape: f32[8,6], index: 1, kind: input, shape index: {}]
  %s2 = inlined_call_operand.hbm [shape: f32[16,32], index: 2, kind: input, shape index: {}]
  %s3 = inlined_call_operand.hbm [shape: f32[6,32], index: 3, kind: input, shape index: {}]
  %s4 = inlined_call_operand.vmem [shape: f32[1,32], index: 4, kind: input, shape index: {}]
  %s5 = inlined_call_operand.hbm [shape: f32[32,32], index: 5, kind: input, shape index: {}]
  %s6 = inlined_call_operand.hbm [shape: f32[32,32], index: 6, kind: input, shape index: {}]
  %s7 = inlined_call_operand.hbm [shape: f32[32,32], index: 7, kind: input, shape index: {}]
  %s8 = inlined_call_operand.vmem [shape: f32[1,32], index: 8, kind: input, shape index: {}]
  %s9 = inlined_call_operand.vmem [shape: f32[1,32], index: 9, kind: input, shape index: {}]
  %s10 = inlined_call_operand.vmem [shape: f32[1,32], index: 10, kind: input, shape index: {}]
  %s11 = inlined_call_operand.vmem [shape: f32[1,32], index: 11, kind: input, shape index: {}]
  %s12 = inlined_call_operand.hbm [shape: f32[32,32], index: 12, kind: input, shape index: {}]
  %s13 = inlined_call_operand.vmem [shape: f32[1,32], index: 13, kind: input, shape index: {}]
  %s14 = inlined_call_operand.hbm [shape: f32[32,128], index: 14, kind: input, shape index: {}]
  %s15 = inlined_call_operand.vmem [shape: f32[1,128], index: 15, kind: input, shape index: {}]
  %s16 = inlined_call_operand.vmem [shape: f32[1,128], index: 16, kind: input, shape index: {}]
  %s17 = inlined_call_operand.vmem [shape: f32[1,128], index: 17, kind: input, shape index: {}]
  %s18 = inlined_call_operand.hbm [shape: f32[8,128], index: 18, kind: output, shape index: {}]
  %s19 = sld [smem:[#allocation0]]
  $region118: #{tpu_custom_call.1} parent=0
    _
  %s21 = ssub.s32 1, %s19
  %s22 = scalar_select 0, %s21, %s19
  $region1: #{tpu_custom_call.1} parent=0
    #allocation2 [shape = 'u8[4096]{0}', space=vmem, size = 0x1000, scoped, tag = 'input window, operand 0, single buffered']
    #allocation3 [shape = 's32[1]{0}', space=sflag, size = 0x4, scoped, tag = 'scoped memory for tpu_custom_call.1']
    #allocation4 [shape = 's32[1]{0}', space=sflag, size = 0x4, scoped, tag = 'scoped memory for tpu_custom_call.1']
    #allocation5 [shape = 'u8[4096]{0}', space=vmem, size = 0x1000, scoped, tag = 'input window, operand 1, single buffered']
    #allocation6 [shape = 's32[1]{0}', space=sflag, size = 0x4, scoped, tag = 'scoped memory for tpu_custom_call.1']
    #allocation7 [shape = 'u8[8192]{0}', space=vmem, size = 0x2000, scoped, tag = 'input window, operand 2, single buffered']
    #allocation8 [shape = 'u8[4096]{0}', space=vmem, size = 0x1000, scoped, tag = 'input window, operand 3, single buffered']
    #allocation9 [shape = 's32[1]{0}', space=sflag, size = 0x4, scoped, tag = 'scoped memory for tpu_custom_call.1']
    #allocation10 [shape = 'u8[16384]{0}', space=vmem, size = 0x4000, scoped, tag = 'input window, operand 5, single buffered']
    #allocation11 [shape = 'u8[16384]{0}', space=vmem, size = 0x4000, scoped, tag = 'input window, operand 6, single buffered']
    #allocation12 [shape = 's32[1]{0}', space=sflag, size = 0x4, scoped, tag = 'scoped memory for tpu_custom_call.1']
    #allocation13 [shape = 'u8[16384]{0}', space=vmem, size = 0x4000, scoped, tag = 'input window, operand 7, single buffered']
    #allocation14 [shape = 'u8[16384]{0}', space=vmem, size = 0x4000, scoped, tag = 'input window, operand 12, single buffered']
    #allocation15 [shape = 's32[1]{0}', space=sflag, size = 0x4, scoped, tag = 'scoped memory for tpu_custom_call.1']
    #allocation16 [shape = 'u8[16384]{0}', space=vmem, size = 0x4000, scoped, tag = 'input window, operand 14, single buffered']
    #allocation17 [shape = 'u8[4096]{0}', space=vmem, size = 0x1000, scoped, tag = 'output window, operand 0, single buffered']
    %23 = vsyncpa [#allocation3], 0
    %24 = vsyncpa [#allocation6], 0
    %25 = vsyncpa [#allocation9], 0
    %26 = vsyncpa [#allocation12], 0
    %27 = vsyncpa [#allocation15], 0
    %28 = vsyncpa [#allocation4], 0
    // Predicated region
    $region2: #{tpu_custom_call.1} parent=1 // pred_check
      _
    $region3: #{tpu_custom_call.1} parent=1 // pred_check_branch
      %30 = sbr.rel (0) target = $region5
    $region4: #{tpu_custom_call.1} parent=1 // pred_region
      %s32 = ssub.s32 128, 128
      %33 = vsyncadd [#allocation3], %s32
      %s35 = sshll.u32 [#allocation2], 4
      %s36 = int_to_ptr.vmem [resolvable:$true] %s35
      %38 = dma.hbm_to_vmem [thread:$0]  %s0, 128, %s36, [#allocation3]
    $region5: #{tpu_custom_call.1} parent=1 // pred_fallthru
      _
    // Predicated region
    $region6: #{tpu_custom_call.1} parent=1 // pred_check
      _
    $region7: #{tpu_custom_call.1} parent=1 // pred_check_branch
      %40 = sbr.rel (0) target = $region9
    $region8: #{tpu_custom_call.1} parent=1 // pred_region
      %s42 = ssub.s32 128, 128
      %43 = vsyncadd [#allocation6], %s42
      %s45 = sshll.u32 [#allocation5], 4
      %s46 = int_to_ptr.vmem [resolvable:$true] %s45
      %48 = dma.hbm_to_vmem [thread:$0]  %s1, 128, %s46, [#allocation6]
    $region9: #{tpu_custom_call.1} parent=1 // pred_fallthru
      _
    // Predicated region
    $region10: #{tpu_custom_call.1} parent=1 // pred_check
      _
    $region11: #{tpu_custom_call.1} parent=1 // pred_check_branch
      %50 = sbr.rel (0) target = $region13
    $region12: #{tpu_custom_call.1} parent=1 // pred_region
      %s52 = ssub.s32 256, 256
      %53 = vsyncadd [#allocation6], %s52
      %s54 = sshll.u32 [#allocation7], 4
      %s55 = int_to_ptr.vmem [resolvable:$true] %s54
      %60 = dma.hbm_to_vmem [thread:$0]  %s2, 256, %s55, [#allocation6], 128, 128, 8
    $region13: #{tpu_custom_call.1} parent=1 // pred_fallthru
      _
    // Predicated region
    $region14: #{tpu_custom_call.1} parent=1 // pred_check
      _
    $region15: #{tpu_custom_call.1} parent=1 // pred_check_branch
      %62 = sbr.rel (0) target = $region17
    $region16: #{tpu_custom_call.1} parent=1 // pred_region
      %s64 = ssub.s32 128, 128
      %65 = vsyncadd [#allocation9], %s64
      %s67 = sshll.u32 [#allocation8], 4
      %s68 = int_to_ptr.vmem [resolvable:$true] %s67
      %70 = dma.hbm_to_vmem [thread:$0]  %s3, 128, %s68, [#allocation9]
    $region17: #{tpu_custom_call.1} parent=1 // pred_fallthru
      _
    // Predicated region
    $region18: #{tpu_custom_call.1} parent=1 // pred_check
      _
    $region19: #{tpu_custom_call.1} parent=1 // pred_check_branch
      %72 = sbr.rel (0) target = $region21
    $region20: #{tpu_custom_call.1} parent=1 // pred_region
      _
    $region21: #{tpu_custom_call.1} parent=1 // pred_fallthru
      _
    // Predicated region
    $region22: #{tpu_custom_call.1} parent=1 // pred_check
      _
    $region23: #{tpu_custom_call.1} parent=1 // pred_check_branch
      %74 = sbr.rel (0) target = $region25
    $region24: #{tpu_custom_call.1} parent=1 // pred_region
      %s76 = ssub.s32 512, 512
      %77 = vsyncadd [#allocation9], %s76
      %s78 = sshll.u32 [#allocation10], 4
      %s79 = int_to_ptr.vmem [resolvable:$true] %s78
      %84 = dma.hbm_to_vmem [thread:$0]  %s5, 512, %s79, [#allocation9], 128, 128, 8
    $region25: #{tpu_custom_call.1} parent=1 // pred_fallthru
      _
    // Predicated region
    $region26: #{tpu_custom_call.1} parent=1 // pred_check
      _
    $region27: #{tpu_custom_call.1} parent=1 // pred_check_branch
      %86 = sbr.rel (0) target = $region29
    $region28: #{tpu_custom_call.1} parent=1 // pred_region
      %s88 = ssub.s32 512, 512
      %89 = vsyncadd [#allocation12], %s88
      %s90 = sshll.u32 [#allocation11], 4
      %s91 = int_to_ptr.vmem [resolvable:$true] %s90
      %96 = dma.hbm_to_vmem [thread:$0]  %s6, 512, %s91, [#allocation12], 128, 128, 8
    $region29: #{tpu_custom_call.1} parent=1 // pred_fallthru
      _
    // Predicated region
    $region30: #{tpu_custom_call.1} parent=1 // pred_check
      _
    $region31: #{tpu_custom_call.1} parent=1 // pred_check_branch
      %98 = sbr.rel (0) target = $region33
    $region32: #{tpu_custom_call.1} parent=1 // pred_region
      %s100 = ssub.s32 512, 512
      %101 = vsyncadd [#allocation12], %s100
      %s102 = sshll.u32 [#allocation13], 4
      %s103 = int_to_ptr.vmem [resolvable:$true] %s102
      %108 = dma.hbm_to_vmem [thread:$0]  %s7, 512, %s103, [#allocation12], 128, 128, 8
    $region33: #{tpu_custom_call.1} parent=1 // pred_fallthru
      _
    // Predicated region
    $region34: #{tpu_custom_call.1} parent=1 // pred_check
      _
    $region35: #{tpu_custom_call.1} parent=1 // pred_check_branch
      %110 = sbr.rel (0) target = $region37
    $region36: #{tpu_custom_call.1} parent=1 // pred_region
      _
    $region37: #{tpu_custom_call.1} parent=1 // pred_fallthru
      _
    // Predicated region
    $region38: #{tpu_custom_call.1} parent=1 // pred_check
      _
    $region39: #{tpu_custom_call.1} parent=1 // pred_check_branch
      %112 = sbr.rel (0) target = $region41
    $region40: #{tpu_custom_call.1} parent=1 // pred_region
      _
    $region41: #{tpu_custom_call.1} parent=1 // pred_fallthru
      _
    // Predicated region
    $region42: #{tpu_custom_call.1} parent=1 // pred_check
      _
    $region43: #{tpu_custom_call.1} parent=1 // pred_check_branch
      %114 = sbr.rel (0) target = $region45
    $region44: #{tpu_custom_call.1} parent=1 // pred_region
      _
    $region45: #{tpu_custom_call.1} parent=1 // pred_fallthru
      _
    // Predicated region
    $region46: #{tpu_custom_call.1} parent=1 // pred_check
      _
    $region47: #{tpu_custom_call.1} parent=1 // pred_check_branch
      %116 = sbr.rel (0) target = $region49
    $region48: #{tpu_custom_call.1} parent=1 // pred_region
      _
    $region49: #{tpu_custom_call.1} parent=1 // pred_fallthru
      _
    // Predicated region
    $region50: #{tpu_custom_call.1} parent=1 // pred_check
      _
    $region51: #{tpu_custom_call.1} parent=1 // pred_check_branch
      %118 = sbr.rel (0) target = $region53
    $region52: #{tpu_custom_call.1} parent=1 // pred_region
      %s120 = ssub.s32 512, 512
      %121 = vsyncadd [#allocation15], %s120
      %s122 = sshll.u32 [#allocation14], 4
      %s123 = int_to_ptr.vmem [resolvable:$true] %s122
      %128 = dma.hbm_to_vmem [thread:$0]  %s12, 512, %s123, [#allocation15], 128, 128, 8
    $region53: #{tpu_custom_call.1} parent=1 // pred_fallthru
      _
    // Predicated region
    $region54: #{tpu_custom_call.1} parent=1 // pred_check
      _
    $region55: #{tpu_custom_call.1} parent=1 // pred_check_branch
      %130 = sbr.rel (0) target = $region57
    $region56: #{tpu_custom_call.1} parent=1 // pred_region
      _
    $region57: #{tpu_custom_call.1} parent=1 // pred_fallthru
      _
    // Predicated region
    $region58: #{tpu_custom_call.1} parent=1 // pred_check
      _
    $region59: #{tpu_custom_call.1} parent=1 // pred_check_branch
      %132 = sbr.rel (0) target = $region61
    $region60: #{tpu_custom_call.1} parent=1 // pred_region
      %s134 = ssub.s32 512, 512
      %135 = vsyncadd [#allocation15], %s134
      %s136 = sshll.u32 [#allocation16], 4
      %s137 = int_to_ptr.vmem [resolvable:$true] %s136
      %142 = dma.hbm_to_vmem [thread:$0]  %s14, 512, %s137, [#allocation15], 128, 128, 8
    $region61: #{tpu_custom_call.1} parent=1 // pred_fallthru
      _
    // Predicated region
    $region62: #{tpu_custom_call.1} parent=1 // pred_check
      _
    $region63: #{tpu_custom_call.1} parent=1 // pred_check_branch
      %144 = sbr.rel (0) target = $region65
    $region64: #{tpu_custom_call.1} parent=1 // pred_region
      _
    $region65: #{tpu_custom_call.1} parent=1 // pred_fallthru
      _
    // Predicated region
    $region66: #{tpu_custom_call.1} parent=1 // pred_check
      _
    $region67: #{tpu_custom_call.1} parent=1 // pred_check_branch
      %146 = sbr.rel (0) target = $region69
    $region68: #{tpu_custom_call.1} parent=1 // pred_region
      _
    $region69: #{tpu_custom_call.1} parent=1 // pred_fallthru
      _
    // Predicated region
    $region70: #{tpu_custom_call.1} parent=1 // pred_check
      _
    $region71: #{tpu_custom_call.1} parent=1 // pred_check_branch
      %148 = sbr.rel (0) target = $region73
    $region72: #{tpu_custom_call.1} parent=1 // pred_region
      _
    $region73: #{tpu_custom_call.1} parent=1 // pred_fallthru
      _
    // Predicated region
    $region74: #{tpu_custom_call.1} parent=1 // pred_check
      _
    $region75: #{tpu_custom_call.1} parent=1 // pred_check_branch
      %150 = sbr.rel (0) target = $region77
    $region76: #{tpu_custom_call.1} parent=1 // pred_region
      %151 = dma.done [#allocation3], 128
    $region77: #{tpu_custom_call.1} parent=1 // pred_fallthru
      _
    // Predicated region
    $region78: #{tpu_custom_call.1} parent=1 // pred_check
      _
    $region79: #{tpu_custom_call.1} parent=1 // pred_check_branch
      %153 = sbr.rel (0) target = $region81
    $region80: #{tpu_custom_call.1} parent=1 // pred_region
      %154 = dma.done [#allocation6], 128
    $region81: #{tpu_custom_call.1} parent=1 // pred_fallthru
      _
    // Predicated region
    $region82: #{tpu_custom_call.1} parent=1 // pred_check
      _
    $region83: #{tpu_custom_call.1} parent=1 // pred_check_branch
      %156 = sbr.rel (0) target = $region85
    $region84: #{tpu_custom_call.1} parent=1 // pred_region
      %157 = dma.done [#allocation6], 256
    $region85: #{tpu_custom_call.1} parent=1 // pred_fallthru
      _
    // Predicated region
    $region86: #{tpu_custom_call.1} parent=1 // pred_check
      _
    $region87: #{tpu_custom_call.1} parent=1 // pred_check_branch
      %159 = sbr.rel (0) target = $region89
    $region88: #{tpu_custom_call.1} parent=1 // pred_region
      %160 = dma.done [#allocation9], 128
    $region89: #{tpu_custom_call.1} parent=1 // pred_fallthru
      _
    // Predicated region
    $region90: #{tpu_custom_call.1} parent=1 // pred_check
      _
    $region91: #{tpu_custom_call.1} parent=1 // pred_check_branch
      %162 = sbr.rel (0) target = $region93
    $region92: #{tpu_custom_call.1} parent=1 // pred_region
      %163 = dma.done [#allocation9], 512
    $region93: #{tpu_custom_call.1} parent=1 // pred_fallthru
      _
    // Predicated region
    $region94: #{tpu_custom_call.1} parent=1 // pred_check
      _
    $region95: #{tpu_custom_call.1} parent=1 // pred_check_branch
      %165 = sbr.rel (0) target = $region97
    $region96: #{tpu_custom_call.1} parent=1 // pred_region
      %166 = dma.done [#allocation12], 512
    $region97: #{tpu_custom_call.1} parent=1 // pred_fallthru
      _
    // Predicated region
    $region98: #{tpu_custom_call.1} parent=1 // pred_check
      _
    $region99: #{tpu_custom_call.1} parent=1 // pred_check_branch
      %168 = sbr.rel (0) target = $region101
    $region100: #{tpu_custom_call.1} parent=1 // pred_region
      %169 = dma.done [#allocation12], 512
    $region101: #{tpu_custom_call.1} parent=1 // pred_fallthru
      _
    // Predicated region
    $region102: #{tpu_custom_call.1} parent=1 // pred_check
      _
    $region103: #{tpu_custom_call.1} parent=1 // pred_check_branch
      %171 = sbr.rel (0) target = $region105
    $region104: #{tpu_custom_call.1} parent=1 // pred_region
      %172 = dma.done [#allocation15], 512
    $region105: #{tpu_custom_call.1} parent=1 // pred_fallthru
      _
    // Predicated region
    $region106: #{tpu_custom_call.1} parent=1 // pred_check
      _
    $region107: #{tpu_custom_call.1} parent=1 // pred_check_branch
      %174 = sbr.rel (0) target = $region109
    $region108: #{tpu_custom_call.1} parent=1 // pred_region
      %175 = dma.done [#allocation15], 512
    $region109: #{tpu_custom_call.1} parent=1 // pred_fallthru
      _
    %v176 = vld [vmem:[#allocation2] sm:$0xff]
    %v177 = vld [vmem:[#allocation5] sm:$0xff]
    %v178 = vld [vmem:[#allocation7] sm:$0xff]
    %v179 = vld [vmem:[#allocation7 + $0x8] sm:$0xff]
    %v180 = vld [vmem:[#allocation8] sm:$0x3f]
    %vm181 = vcmask 48128
    %v183 = vsel %vm181, %v177, 0
    %vm185 = vcmask 1045504
    %v187 = vsel %vm185, %v180, 0
    %189 = vmatprep.subr.mxu0 0.0
    %190 = vmatpush1.msra.mxu0 0.0
    %191 = vmatprep.subr.mxu0 0.0
    %192 = vmatpush1.msra.mxu0 0.0
    %193 = vmatprep.subr.mxu0 0.0
    %194 = vmatpush1.msra.mxu0 0.0
    %195 = vmatprep.subr.mxu0 0.0
    %196 = vmatpush1.msra.mxu0 0.0
    %197 = vmatprep.subr.mxu0 0.0
    %198 = vmatpush1.msra.mxu0 0.0
    %199 = vmatprep.subr.mxu0 0.0
    %200 = vmatpush1.msra.mxu0 0.0
    %201 = vmatprep.subr.mxu0 0.0
    %202 = vmatpush1.msra.mxu0 0.0
    %203 = vmatprep.subr.mxu0 0.0
    %204 = vmatpush1.msra.mxu0 0.0
    %205 = vmatprep.subr.mxu0 0.0
    %206 = vmatpush1.msra.mxu0 0.0
    %207 = vmatprep.subr.mxu0 0.0
    %208 = vmatpush1.msra.mxu0 0.0
    %209 = vmatprep.subr.mxu0 0.0
    %210 = vmatpush1.msra.mxu0 0.0
    %211 = vmatprep.subr.mxu0 0.0
    %212 = vmatpush1.msra.mxu0 0.0
    %213 = vmatprep.subr.mxu0 0.0
    %214 = vmatpush1.msra.mxu0 0.0
    %215 = vmatprep.subr.mxu0 0.0
    %216 = vmatpush1.msra.mxu0 0.0
    %217 = vmatprep.subr.mxu0 0.0
    %218 = vmatpush1.msra.mxu0 0.0
    %219 = vmatprep.subr.mxu0 0.0
    %220 = vmatpush1.msra.mxu0 %v187
    %221 = vmatprep.subr.mxu0 0.0
    %222 = vmatpush2.msra.mxu0 0.0
    %223 = vmatprep.subr.mxu0 0.0
    %224 = vmatpush2.msra.mxu0 0.0
    %225 = vmatprep.subr.mxu0 0.0
    %226 = vmatpush2.msra.mxu0 0.0
    %227 = vmatprep.subr.mxu0 0.0
    %228 = vmatpush2.msra.mxu0 0.0
    %229 = vmatprep.subr.mxu0 0.0
    %230 = vmatpush2.msra.mxu0 0.0
    %231 = vmatprep.subr.mxu0 0.0
    %232 = vmatpush2.msra.mxu0 0.0
    %233 = vmatprep.subr.mxu0 0.0
    %234 = vmatpush2.msra.mxu0 0.0
    %235 = vmatprep.subr.mxu0 0.0
    %236 = vmatpush2.msra.mxu0 0.0
    %237 = vmatprep.subr.mxu0 0.0
    %238 = vmatpush2.msra.mxu0 0.0
    %239 = vmatprep.subr.mxu0 0.0
    %240 = vmatpush2.msra.mxu0 0.0
    %241 = vmatprep.subr.mxu0 0.0
    %242 = vmatpush2.msra.mxu0 0.0
    %243 = vmatprep.subr.mxu0 0.0
    %244 = vmatpush2.msra.mxu0 0.0
    %245 = vmatprep.subr.mxu0 0.0
    %246 = vmatpush2.msra.mxu0 0.0
    %247 = vmatprep.subr.mxu0 0.0
    %248 = vmatpush2.msra.mxu0 0.0
    %249 = vmatprep.subr.mxu0 0.0
    %250 = vmatpush2.msra.mxu0 0.0
    %251 = vmatprep.subr.mxu0 0.0
    %252 = vmatpush2.msra.mxu0 0.0
    %253 = vmatprep.mubr.f32.mxu0 0.0
    %254 = vmatmul.mubr.f32.gmra.mxu0 %v183
    %v255 = vpop.f32.mrf.mxu0
    %v256 = vadd.f32 0.0, %v255
    %v257 = vpop.f32.mrf.mxu0
    %258 = vdwg.mxu0
    %vm259 = vcmask 130048
    %v261 = vsel %vm259, %v176, 0
    %263 = vmatprep.subr.mxu0 0.0
    %264 = vmatpush1.msra.mxu0 0.0
    %265 = vmatprep.subr.mxu0 0.0
    %266 = vmatpush1.msra.mxu0 0.0
    %267 = vmatprep.subr.mxu0 0.0
    %268 = vmatpush1.msra.mxu0 0.0
    %269 = vmatprep.subr.mxu0 0.0
    %270 = vmatpush1.msra.mxu0 0.0
    %271 = vmatprep.subr.mxu0 0.0
    %272 = vmatpush1.msra.mxu0 0.0
    %273 = vmatprep.subr.mxu0 0.0
    %274 = vmatpush1.msra.mxu0 0.0
    %275 = vmatprep.subr.mxu0 0.0
    %276 = vmatpush1.msra.mxu0 0.0
    %277 = vmatprep.subr.mxu0 0.0
    %278 = vmatpush1.msra.mxu0 0.0
    %279 = vmatprep.subr.mxu0 0.0
    %280 = vmatpush1.msra.mxu0 0.0
    %281 = vmatprep.subr.mxu0 0.0
    %282 = vmatpush1.msra.mxu0 0.0
    %283 = vmatprep.subr.mxu0 0.0
    %284 = vmatpush1.msra.mxu0 0.0
    %285 = vmatprep.subr.mxu0 0.0
    %286 = vmatpush1.msra.mxu0 0.0
    %287 = vmatprep.subr.mxu0 0.0
    %288 = vmatpush1.msra.mxu0 0.0
    %289 = vmatprep.subr.mxu0 0.0
    %290 = vmatpush1.msra.mxu0 0.0
    %291 = vmatprep.subr.mxu0 0.0
    %292 = vmatpush1.msra.mxu0 %v179
    %293 = vmatprep.subr.mxu0 0.0
    %294 = vmatpush1.msra.mxu0 %v178
    %295 = vmatprep.subr.mxu0 0.0
    %296 = vmatpush2.msra.mxu0 0.0
    %297 = vmatprep.subr.mxu0 0.0
    %298 = vmatpush2.msra.mxu0 0.0
    %299 = vmatprep.subr.mxu0 0.0
    %300 = vmatpush2.msra.mxu0 0.0
    %301 = vmatprep.subr.mxu0 0.0
    %302 = vmatpush2.msra.mxu0 0.0
    %303 = vmatprep.subr.mxu0 0.0
    %304 = vmatpush2.msra.mxu0 0.0
    %305 = vmatprep.subr.mxu0 0.0
    %306 = vmatpush2.msra.mxu0 0.0
    %307 = vmatprep.subr.mxu0 0.0
    %308 = vmatpush2.msra.mxu0 0.0
    %309 = vmatprep.subr.mxu0 0.0
    %310 = vmatpush2.msra.mxu0 0.0
    %311 = vmatprep.subr.mxu0 0.0
    %312 = vmatpush2.msra.mxu0 0.0
    %313 = vmatprep.subr.mxu0 0.0
    %314 = vmatpush2.msra.mxu0 0.0
    %315 = vmatprep.subr.mxu0 0.0
    %316 = vmatpush2.msra.mxu0 0.0
    %317 = vmatprep.subr.mxu0 0.0
    %318 = vmatpush2.msra.mxu0 0.0
    %319 = vmatprep.subr.mxu0 0.0
    %320 = vmatpush2.msra.mxu0 0.0
    %321 = vmatprep.subr.mxu0 0.0
    %322 = vmatpush2.msra.mxu0 0.0
    %323 = vmatprep.subr.mxu0 0.0
    %324 = vmatpush2.msra.mxu0 0.0
    %325 = vmatprep.subr.mxu0 0.0
    %326 = vmatpush2.msra.mxu0 0.0
    %327 = vmatprep.mubr.f32.mxu0 0.0
    %328 = vmatmul.mubr.f32.gmra.mxu0 %v261
    %v329 = vpop.f32.mrf.mxu0
    %v330 = vadd.f32 %v256, %v329
    %v331 = vpop.f32.mrf.mxu0
    %332 = vdwg.mxu0
    %v333 = vld [vmem:[%s4] sm:$0x1]
    %v335 = vlaneseq
    %v336 = vshrl.u32 %v335, 7
    %v337 = vsub.s32 0, %v336
    %v338 = vrot.slane %v333, %v337
    %v340 = vadd.f32 %v330, %v338
    %v341 = vmax.f32 %v340, 0.0
    %v342 = vld [vmem:[#allocation10] sm:$0xff]
    %v343 = vld [vmem:[#allocation10 + $0x8] sm:$0xff]
    %v344 = vld [vmem:[#allocation10 + $0x10] sm:$0xff]
    %v345 = vld [vmem:[#allocation10 + $0x18] sm:$0xff]
    %v346 = vld [vmem:[%s8] sm:$0x1]
    %v348 = vlaneseq
    %v349 = vshrl.u32 %v348, 7
    %v350 = vsub.s32 0, %v349
    %v351 = vrot.slane %v346, %v350
    %vm353 = vcmask 261120
    %v355 = vsel %vm353, %v341, 0
    %357 = vmatprep.subr.mxu0 0.0
    %358 = vmatpush1.msra.mxu0 0.0
    %359 = vmatprep.subr.mxu0 0.0
    %360 = vmatpush1.msra.mxu0 0.0
    %361 = vmatprep.subr.mxu0 0.0
    %362 = vmatpush1.msra.mxu0 0.0
    %363 = vmatprep.subr.mxu0 0.0
    %364 = vmatpush1.msra.mxu0 0.0
    %365 = vmatprep.subr.mxu0 0.0
    %366 = vmatpush1.msra.mxu0 0.0
    %367 = vmatprep.subr.mxu0 0.0
    %368 = vmatpush1.msra.mxu0 0.0
    %369 = vmatprep.subr.mxu0 0.0
    %370 = vmatpush1.msra.mxu0 0.0
    %371 = vmatprep.subr.mxu0 0.0
    %372 = vmatpush1.msra.mxu0 0.0
    %373 = vmatprep.subr.mxu0 0.0
    %374 = vmatpush1.msra.mxu0 0.0
    %375 = vmatprep.subr.mxu0 0.0
    %376 = vmatpush1.msra.mxu0 0.0
    %377 = vmatprep.subr.mxu0 0.0
    %378 = vmatpush1.msra.mxu0 0.0
    %379 = vmatprep.subr.mxu0 0.0
    %380 = vmatpush1.msra.mxu0 0.0
    %381 = vmatprep.subr.mxu0 0.0
    %382 = vmatpush1.msra.mxu0 %v345
    %383 = vmatprep.subr.mxu0 0.0
    %384 = vmatpush1.msra.mxu0 %v344
    %385 = vmatprep.subr.mxu0 0.0
    %386 = vmatpush1.msra.mxu0 %v343
    %387 = vmatprep.subr.mxu0 0.0
    %388 = vmatpush1.msra.mxu0 %v342
    %389 = vmatprep.subr.mxu0 0.0
    %390 = vmatpush2.msra.mxu0 0.0
    %391 = vmatprep.subr.mxu0 0.0
    %392 = vmatpush2.msra.mxu0 0.0
    %393 = vmatprep.subr.mxu0 0.0
    %394 = vmatpush2.msra.mxu0 0.0
    %395 = vmatprep.subr.mxu0 0.0
    %396 = vmatpush2.msra.mxu0 0.0
    %397 = vmatprep.subr.mxu0 0.0
    %398 = vmatpush2.msra.mxu0 0.0
    %399 = vmatprep.subr.mxu0 0.0
    %400 = vmatpush2.msra.mxu0 0.0
    %401 = vmatprep.subr.mxu0 0.0
    %402 = vmatpush2.msra.mxu0 0.0
    %403 = vmatprep.subr.mxu0 0.0
    %404 = vmatpush2.msra.mxu0 0.0
    %405 = vmatprep.subr.mxu0 0.0
    %406 = vmatpush2.msra.mxu0 0.0
    %407 = vmatprep.subr.mxu0 0.0
    %408 = vmatpush2.msra.mxu0 0.0
    %409 = vmatprep.subr.mxu0 0.0
    %410 = vmatpush2.msra.mxu0 0.0
    %411 = vmatprep.subr.mxu0 0.0
    %412 = vmatpush2.msra.mxu0 0.0
    %413 = vmatprep.subr.mxu0 0.0
    %414 = vmatpush2.msra.mxu0 0.0
    %415 = vmatprep.subr.mxu0 0.0
    %416 = vmatpush2.msra.mxu0 0.0
    %417 = vmatprep.subr.mxu0 0.0
    %418 = vmatpush2.msra.mxu0 0.0
    %419 = vmatprep.subr.mxu0 0.0
    %420 = vmatpush2.msra.mxu0 0.0
    %421 = vmatprep.mubr.f32.mxu0 0.0
    %422 = vmatmul.mubr.f32.gmra.mxu0 %v355
    %v423 = vpop.f32.mrf.mxu0
    %v424 = vadd.f32 %v351, %v423
    %v425 = vpop.f32.mrf.mxu0
    %426 = vdwg.mxu0
    %v427 = vxor.u32 %v424, 2147483648
    %v428 = vmul.f32 %v427, 1.442695
    %v429 = vpow.pop %v428
    %v430 = vadd.f32 %v429, 1.0
    %v431 = vrcp.pop %v430
    %v432 = vmul.f32 1.0, %v431
    %v433 = vld [vmem:[#allocation11] sm:$0xff]
    %v434 = vld [vmem:[#allocation11 + $0x8] sm:$0xff]
    %v435 = vld [vmem:[#allocation11 + $0x10] sm:$0xff]
    %v436 = vld [vmem:[#allocation11 + $0x18] sm:$0xff]
    %v437 = vld [vmem:[%s9] sm:$0x1]
    %v439 = vlaneseq
    %v440 = vshrl.u32 %v439, 7
    %v441 = vsub.s32 0, %v440
    %v442 = vrot.slane %v437, %v441
    %444 = vmatprep.subr.mxu0 0.0
    %445 = vmatpush1.msra.mxu0 0.0
    %446 = vmatprep.subr.mxu0 0.0
    %447 = vmatpush1.msra.mxu0 0.0
    %448 = vmatprep.subr.mxu0 0.0
    %449 = vmatpush1.msra.mxu0 0.0
    %450 = vmatprep.subr.mxu0 0.0
    %451 = vmatpush1.msra.mxu0 0.0
    %452 = vmatprep.subr.mxu0 0.0
    %453 = vmatpush1.msra.mxu0 0.0
    %454 = vmatprep.subr.mxu0 0.0
    %455 = vmatpush1.msra.mxu0 0.0
    %456 = vmatprep.subr.mxu0 0.0
    %457 = vmatpush1.msra.mxu0 0.0
    %458 = vmatprep.subr.mxu0 0.0
    %459 = vmatpush1.msra.mxu0 0.0
    %460 = vmatprep.subr.mxu0 0.0
    %461 = vmatpush1.msra.mxu0 0.0
    %462 = vmatprep.subr.mxu0 0.0
    %463 = vmatpush1.msra.mxu0 0.0
    %464 = vmatprep.subr.mxu0 0.0
    %465 = vmatpush1.msra.mxu0 0.0
    %466 = vmatprep.subr.mxu0 0.0
    %467 = vmatpush1.msra.mxu0 0.0
    %468 = vmatprep.subr.mxu0 0.0
    %469 = vmatpush1.msra.mxu0 %v436
    %470 = vmatprep.subr.mxu0 0.0
    %471 = vmatpush1.msra.mxu0 %v435
    %472 = vmatprep.subr.mxu0 0.0
    %473 = vmatpush1.msra.mxu0 %v434
    %474 = vmatprep.subr.mxu0 0.0
    %475 = vmatpush1.msra.mxu0 %v433
    %476 = vmatprep.subr.mxu0 0.0
    %477 = vmatpush2.msra.mxu0 0.0
    %478 = vmatprep.subr.mxu0 0.0
    %479 = vmatpush2.msra.mxu0 0.0
    %480 = vmatprep.subr.mxu0 0.0
    %481 = vmatpush2.msra.mxu0 0.0
    %482 = vmatprep.subr.mxu0 0.0
    %483 = vmatpush2.msra.mxu0 0.0
    %484 = vmatprep.subr.mxu0 0.0
    %485 = vmatpush2.msra.mxu0 0.0
    %486 = vmatprep.subr.mxu0 0.0
    %487 = vmatpush2.msra.mxu0 0.0
    %488 = vmatprep.subr.mxu0 0.0
    %489 = vmatpush2.msra.mxu0 0.0
    %490 = vmatprep.subr.mxu0 0.0
    %491 = vmatpush2.msra.mxu0 0.0
    %492 = vmatprep.subr.mxu0 0.0
    %493 = vmatpush2.msra.mxu0 0.0
    %494 = vmatprep.subr.mxu0 0.0
    %495 = vmatpush2.msra.mxu0 0.0
    %496 = vmatprep.subr.mxu0 0.0
    %497 = vmatpush2.msra.mxu0 0.0
    %498 = vmatprep.subr.mxu0 0.0
    %499 = vmatpush2.msra.mxu0 0.0
    %500 = vmatprep.subr.mxu0 0.0
    %501 = vmatpush2.msra.mxu0 0.0
    %502 = vmatprep.subr.mxu0 0.0
    %503 = vmatpush2.msra.mxu0 0.0
    %504 = vmatprep.subr.mxu0 0.0
    %505 = vmatpush2.msra.mxu0 0.0
    %506 = vmatprep.subr.mxu0 0.0
    %507 = vmatpush2.msra.mxu0 0.0
    %508 = vmatprep.mubr.f32.mxu0 0.0
    %509 = vmatmul.mubr.f32.gmra.mxu0 %v355
    %v510 = vpop.f32.mrf.mxu0
    %v511 = vadd.f32 %v442, %v510
    %v512 = vpop.f32.mrf.mxu0
    %513 = vdwg.mxu0
    %v514 = vxor.u32 %v511, 2147483648
    %v515 = vmul.f32 %v514, 1.442695
    %v516 = vpow.pop %v515
    %v517 = vadd.f32 %v516, 1.0
    %v518 = vrcp.pop %v517
    %v519 = vmul.f32 1.0, %v518
    %v520 = vld [vmem:[#allocation13] sm:$0xff]
    %v521 = vld [vmem:[#allocation13 + $0x8] sm:$0xff]
    %v522 = vld [vmem:[#allocation13 + $0x10] sm:$0xff]
    %v523 = vld [vmem:[#allocation13 + $0x18] sm:$0xff]
    %v524 = vld [vmem:[%s10] sm:$0x1]
    %v526 = vlaneseq
    %v527 = vshrl.u32 %v526, 7
    %v528 = vsub.s32 0, %v527
    %v529 = vrot.slane %v524, %v528
    %531 = vmatprep.subr.mxu0 0.0
    %532 = vmatpush1.msra.mxu0 0.0
    %533 = vmatprep.subr.mxu0 0.0
    %534 = vmatpush1.msra.mxu0 0.0
    %535 = vmatprep.subr.mxu0 0.0
    %536 = vmatpush1.msra.mxu0 0.0
    %537 = vmatprep.subr.mxu0 0.0
    %538 = vmatpush1.msra.mxu0 0.0
    %539 = vmatprep.subr.mxu0 0.0
    %540 = vmatpush1.msra.mxu0 0.0
    %541 = vmatprep.subr.mxu0 0.0
    %542 = vmatpush1.msra.mxu0 0.0
    %543 = vmatprep.subr.mxu0 0.0
    %544 = vmatpush1.msra.mxu0 0.0
    %545 = vmatprep.subr.mxu0 0.0
    %546 = vmatpush1.msra.mxu0 0.0
    %547 = vmatprep.subr.mxu0 0.0
    %548 = vmatpush1.msra.mxu0 0.0
    %549 = vmatprep.subr.mxu0 0.0
    %550 = vmatpush1.msra.mxu0 0.0
    %551 = vmatprep.subr.mxu0 0.0
    %552 = vmatpush1.msra.mxu0 0.0
    %553 = vmatprep.subr.mxu0 0.0
    %554 = vmatpush1.msra.mxu0 0.0
    %555 = vmatprep.subr.mxu0 0.0
    %556 = vmatpush1.msra.mxu0 %v523
    %557 = vmatprep.subr.mxu0 0.0
    %558 = vmatpush1.msra.mxu0 %v522
    %559 = vmatprep.subr.mxu0 0.0
    %560 = vmatpush1.msra.mxu0 %v521
    %561 = vmatprep.subr.mxu0 0.0
    %562 = vmatpush1.msra.mxu0 %v520
    %563 = vmatprep.subr.mxu0 0.0
    %564 = vmatpush2.msra.mxu0 0.0
    %565 = vmatprep.subr.mxu0 0.0
    %566 = vmatpush2.msra.mxu0 0.0
    %567 = vmatprep.subr.mxu0 0.0
    %568 = vmatpush2.msra.mxu0 0.0
    %569 = vmatprep.subr.mxu0 0.0
    %570 = vmatpush2.msra.mxu0 0.0
    %571 = vmatprep.subr.mxu0 0.0
    %572 = vmatpush2.msra.mxu0 0.0
    %573 = vmatprep.subr.mxu0 0.0
    %574 = vmatpush2.msra.mxu0 0.0
    %575 = vmatprep.subr.mxu0 0.0
    %576 = vmatpush2.msra.mxu0 0.0
    %577 = vmatprep.subr.mxu0 0.0
    %578 = vmatpush2.msra.mxu0 0.0
    %579 = vmatprep.subr.mxu0 0.0
    %580 = vmatpush2.msra.mxu0 0.0
    %581 = vmatprep.subr.mxu0 0.0
    %582 = vmatpush2.msra.mxu0 0.0
    %583 = vmatprep.subr.mxu0 0.0
    %584 = vmatpush2.msra.mxu0 0.0
    %585 = vmatprep.subr.mxu0 0.0
    %586 = vmatpush2.msra.mxu0 0.0
    %587 = vmatprep.subr.mxu0 0.0
    %588 = vmatpush2.msra.mxu0 0.0
    %589 = vmatprep.subr.mxu0 0.0
    %590 = vmatpush2.msra.mxu0 0.0
    %591 = vmatprep.subr.mxu0 0.0
    %592 = vmatpush2.msra.mxu0 0.0
    %593 = vmatprep.subr.mxu0 0.0
    %594 = vmatpush2.msra.mxu0 0.0
    %595 = vmatprep.mubr.f32.mxu0 0.0
    %596 = vmatmul.mubr.f32.gmra.mxu0 %v355
    %v597 = vpop.f32.mrf.mxu0
    %v598 = vadd.f32 %v529, %v597
    %v599 = vpop.f32.mrf.mxu0
    %600 = vdwg.mxu0
    %v601 = vld [vmem:[%s11] sm:$0x1]
    %v603 = vlaneseq
    %v604 = vshrl.u32 %v603, 7
    %v605 = vsub.s32 0, %v604
    %v606 = vrot.slane %v601, %v605
    %v608 = vmul.f32 %v432, %v606
    %v609 = vadd.f32 %v598, %v608
    %v610 = vtanh.pop %v609
    %v611 = vsub.f32 1.0, %v519
    %v612 = vmul.f32 %v611, %v610
    %v613 = vld [vmem:[#allocation14] sm:$0xff]
    %v614 = vld [vmem:[#allocation14 + $0x8] sm:$0xff]
    %v615 = vld [vmem:[#allocation14 + $0x10] sm:$0xff]
    %v616 = vld [vmem:[#allocation14 + $0x18] sm:$0xff]
    %v617 = vld [vmem:[%s13] sm:$0x1]
    %v619 = vlaneseq
    %v620 = vshrl.u32 %v619, 7
    %v621 = vsub.s32 0, %v620
    %v622 = vrot.slane %v617, %v621
    %v625 = vsel %vm353, %v612, 0
    %627 = vmatprep.subr.mxu0 0.0
    %628 = vmatpush1.msra.mxu0 0.0
    %629 = vmatprep.subr.mxu0 0.0
    %630 = vmatpush1.msra.mxu0 0.0
    %631 = vmatprep.subr.mxu0 0.0
    %632 = vmatpush1.msra.mxu0 0.0
    %633 = vmatprep.subr.mxu0 0.0
    %634 = vmatpush1.msra.mxu0 0.0
    %635 = vmatprep.subr.mxu0 0.0
    %636 = vmatpush1.msra.mxu0 0.0
    %637 = vmatprep.subr.mxu0 0.0
    %638 = vmatpush1.msra.mxu0 0.0
    %639 = vmatprep.subr.mxu0 0.0
    %640 = vmatpush1.msra.mxu0 0.0
    %641 = vmatprep.subr.mxu0 0.0
    %642 = vmatpush1.msra.mxu0 0.0
    %643 = vmatprep.subr.mxu0 0.0
    %644 = vmatpush1.msra.mxu0 0.0
    %645 = vmatprep.subr.mxu0 0.0
    %646 = vmatpush1.msra.mxu0 0.0
    %647 = vmatprep.subr.mxu0 0.0
    %648 = vmatpush1.msra.mxu0 0.0
    %649 = vmatprep.subr.mxu0 0.0
    %650 = vmatpush1.msra.mxu0 0.0
    %651 = vmatprep.subr.mxu0 0.0
    %652 = vmatpush1.msra.mxu0 %v616
    %653 = vmatprep.subr.mxu0 0.0
    %654 = vmatpush1.msra.mxu0 %v615
    %655 = vmatprep.subr.mxu0 0.0
    %656 = vmatpush1.msra.mxu0 %v614
    %657 = vmatprep.subr.mxu0 0.0
    %658 = vmatpush1.msra.mxu0 %v613
    %659 = vmatprep.subr.mxu0 0.0
    %660 = vmatpush2.msra.mxu0 0.0
    %661 = vmatprep.subr.mxu0 0.0
    %662 = vmatpush2.msra.mxu0 0.0
    %663 = vmatprep.subr.mxu0 0.0
    %664 = vmatpush2.msra.mxu0 0.0
    %665 = vmatprep.subr.mxu0 0.0
    %666 = vmatpush2.msra.mxu0 0.0
    %667 = vmatprep.subr.mxu0 0.0
    %668 = vmatpush2.msra.mxu0 0.0
    %669 = vmatprep.subr.mxu0 0.0
    %670 = vmatpush2.msra.mxu0 0.0
    %671 = vmatprep.subr.mxu0 0.0
    %672 = vmatpush2.msra.mxu0 0.0
    %673 = vmatprep.subr.mxu0 0.0
    %674 = vmatpush2.msra.mxu0 0.0
    %675 = vmatprep.subr.mxu0 0.0
    %676 = vmatpush2.msra.mxu0 0.0
    %677 = vmatprep.subr.mxu0 0.0
    %678 = vmatpush2.msra.mxu0 0.0
    %679 = vmatprep.subr.mxu0 0.0
    %680 = vmatpush2.msra.mxu0 0.0
    %681 = vmatprep.subr.mxu0 0.0
    %682 = vmatpush2.msra.mxu0 0.0
    %683 = vmatprep.subr.mxu0 0.0
    %684 = vmatpush2.msra.mxu0 0.0
    %685 = vmatprep.subr.mxu0 0.0
    %686 = vmatpush2.msra.mxu0 0.0
    %687 = vmatprep.subr.mxu0 0.0
    %688 = vmatpush2.msra.mxu0 0.0
    %689 = vmatprep.subr.mxu0 0.0
    %690 = vmatpush2.msra.mxu0 0.0
    %691 = vmatprep.mubr.f32.mxu0 0.0
    %692 = vmatmul.mubr.f32.gmra.mxu0 %v625
    %v693 = vpop.f32.mrf.mxu0
    %v694 = vadd.f32 %v622, %v693
    %v695 = vpop.f32.mrf.mxu0
    %696 = vdwg.mxu0
    %v697 = vld [vmem:[#allocation16] sm:$0xff]
    %v698 = vld [vmem:[#allocation16 + $0x8] sm:$0xff]
    %v699 = vld [vmem:[#allocation16 + $0x10] sm:$0xff]
    %v700 = vld [vmem:[#allocation16 + $0x18] sm:$0xff]
    %v701 = vld [vmem:[%s15] sm:$0x1]
    %v703 = vlaneseq
    %v704 = vshrl.u32 %v703, 7
    %v705 = vsub.s32 0, %v704
    %v706 = vrot.slane %v701, %v705
    %v709 = vsel %vm353, %v694, 0
    %711 = vmatprep.subr.mxu0 0.0
    %712 = vmatpush1.msra.mxu0 0.0
    %713 = vmatprep.subr.mxu0 0.0
    %714 = vmatpush1.msra.mxu0 0.0
    %715 = vmatprep.subr.mxu0 0.0
    %716 = vmatpush1.msra.mxu0 0.0
    %717 = vmatprep.subr.mxu0 0.0
    %718 = vmatpush1.msra.mxu0 0.0
    %719 = vmatprep.subr.mxu0 0.0
    %720 = vmatpush1.msra.mxu0 0.0
    %721 = vmatprep.subr.mxu0 0.0
    %722 = vmatpush1.msra.mxu0 0.0
    %723 = vmatprep.subr.mxu0 0.0
    %724 = vmatpush1.msra.mxu0 0.0
    %725 = vmatprep.subr.mxu0 0.0
    %726 = vmatpush1.msra.mxu0 0.0
    %727 = vmatprep.subr.mxu0 0.0
    %728 = vmatpush1.msra.mxu0 0.0
    %729 = vmatprep.subr.mxu0 0.0
    %730 = vmatpush1.msra.mxu0 0.0
    %731 = vmatprep.subr.mxu0 0.0
    %732 = vmatpush1.msra.mxu0 0.0
    %733 = vmatprep.subr.mxu0 0.0
    %734 = vmatpush1.msra.mxu0 0.0
    %735 = vmatprep.subr.mxu0 0.0
    %736 = vmatpush1.msra.mxu0 %v700
    %737 = vmatprep.subr.mxu0 0.0
    %738 = vmatpush1.msra.mxu0 %v699
    %739 = vmatprep.subr.mxu0 0.0
    %740 = vmatpush1.msra.mxu0 %v698
    %741 = vmatprep.subr.mxu0 0.0
    %742 = vmatpush1.msra.mxu0 %v697
    %743 = vmatprep.subr.mxu0 0.0
    %744 = vmatpush2.msra.mxu0 0.0
    %745 = vmatprep.subr.mxu0 0.0
    %746 = vmatpush2.msra.mxu0 0.0
    %747 = vmatprep.subr.mxu0 0.0
    %748 = vmatpush2.msra.mxu0 0.0
    %749 = vmatprep.subr.mxu0 0.0
    %750 = vmatpush2.msra.mxu0 0.0
    %751 = vmatprep.subr.mxu0 0.0
    %752 = vmatpush2.msra.mxu0 0.0
    %753 = vmatprep.subr.mxu0 0.0
    %754 = vmatpush2.msra.mxu0 0.0
    %755 = vmatprep.subr.mxu0 0.0
    %756 = vmatpush2.msra.mxu0 0.0
    %757 = vmatprep.subr.mxu0 0.0
    %758 = vmatpush2.msra.mxu0 0.0
    %759 = vmatprep.subr.mxu0 0.0
    %760 = vmatpush2.msra.mxu0 0.0
    %761 = vmatprep.subr.mxu0 0.0
    %762 = vmatpush2.msra.mxu0 0.0
    %763 = vmatprep.subr.mxu0 0.0
    %764 = vmatpush2.msra.mxu0 0.0
    %765 = vmatprep.subr.mxu0 0.0
    %766 = vmatpush2.msra.mxu0 0.0
    %767 = vmatprep.subr.mxu0 0.0
    %768 = vmatpush2.msra.mxu0 0.0
    %769 = vmatprep.subr.mxu0 0.0
    %770 = vmatpush2.msra.mxu0 0.0
    %771 = vmatprep.subr.mxu0 0.0
    %772 = vmatpush2.msra.mxu0 0.0
    %773 = vmatprep.subr.mxu0 0.0
    %774 = vmatpush2.msra.mxu0 0.0
    %775 = vmatprep.mubr.f32.mxu0 0.0
    %776 = vmatmul.mubr.f32.gmra.mxu0 %v709
    %v777 = vpop.f32.mrf.mxu0
    %v778 = vadd.f32 %v706, %v777
    %v779 = vpop.f32.mrf.mxu0
    %780 = vdwg.mxu0
    %781 = vadd.xlane.f32.xlu0 %v778
    %v782 = vpop.xlane.xlu0 %781
    %v783 = vmul.f32 %v782, 0.0625
    %v784 = vmul.f32 %v778, %v778
    %785 = vadd.xlane.f32.xlu0 %v784
    %v786 = vpop.xlane.xlu0 %785
    %v787 = vmul.f32 %v786, 0.0625
    %v788 = vmul.f32 %v783, %v783
    %v789 = vsub.f32 %v787, %v788
    %v790 = vsub.f32 %v778, %v783
    %v791 = vadd.f32 %v789, 1e-05
    %v792 = vrsqrt.pop %v791
    %v793 = vmul.f32 %v790, %v792
    %v794 = vld [vmem:[%s16] sm:$0x1]
    %v796 = vlaneseq
    %v797 = vshrl.u32 %v796, 7
    %v798 = vsub.s32 0, %v797
    %v799 = vrot.slane %v794, %v798
    %v801 = vmul.f32 %v793, %v799
    %v802 = vld [vmem:[%s17] sm:$0x1]
    %v804 = vlaneseq
    %v805 = vshrl.u32 %v804, 7
    %v806 = vsub.s32 0, %v805
    %v807 = vrot.slane %v802, %v806
    %v809 = vadd.f32 %v801, %v807
    %810 = vst [vmem:[#allocation17] sm:$0xff] %v809
    // Predicated region
    $region110: #{tpu_custom_call.1} parent=1 // pred_check
      _
    $region111: #{tpu_custom_call.1} parent=1 // pred_check_branch
      %812 = sbr.rel (0) target = $region113
    $region112: #{tpu_custom_call.1} parent=1 // pred_region
      %s814 = ssub.s32 128, 128
      %815 = vsyncadd [#allocation4], %s814
      %s817 = sshll.u32 [#allocation17], 4
      %s818 = int_to_ptr.vmem [resolvable:$true] %s817
      %820 = dma.vmem_to_hbm [thread:$0]  %s818, 128, %s18, [#allocation4]
    $region113: #{tpu_custom_call.1} parent=1 // pred_fallthru
      _
    // Predicated region
    $region114: #{tpu_custom_call.1} parent=1 // pred_check
      _
    $region115: #{tpu_custom_call.1} parent=1 // pred_check_branch
      %822 = sbr.rel (0) target = $region117
    $region116: #{tpu_custom_call.1} parent=1 // pred_region
      %823 = dma.done [#allocation4], 128
    $region117: #{tpu_custom_call.1} parent=1 // pred_fallthru
      _
    %824 = vsyncpa [#allocation3], 1
    %825 = vsyncpa [#allocation6], 1
    %826 = vsyncpa [#allocation9], 1
    %827 = vsyncpa [#allocation12], 1
    %828 = vsyncpa [#allocation15], 1
    %829 = vsyncpa [#allocation4], 1

</llo_original>
